<compile_context>
chip_gen: v5e
topology: v5e:2x2
jax: 0.10.0
libtpu: 0.0.40
codegen_flags: <defaults>
</compile_context>

<pallas_src>
import functools

import jax
import jax.numpy as jnp
from jax.experimental import pallas as pl
from jax.experimental.pallas import tpu as pltpu


def _downsample_conv_kernel(x_ref, w01_ref, w2_ref, b_ref, o_ref, *, bn, ho, wo, cin):
    """bn images, fused im2col 3x3/stride-2 conv as 6 accumulating matmuls.

    x_ref   : (bn, HP, 2, WP, 2*cin)  even/odd-split padded NHWC activations
    w01_ref : (3, 2*cin, tc)          kw=0 and kw=1 taps stacked along K, per kh
    w2_ref  : (3,   cin, tc)          kw=2 tap, per kh
    b_ref   : (1, tc)                 f32 bias slice
    o_ref   : (bn*ho*wo, tc)
    """
    m = bn * ho * wo
    acc = None
    for kh in range(3):
        rp, par = kh // 2, kh % 2          # input row = 2*oh + kh = 2*(oh+rp) + par
        # kw=0 / kw=1 merged: both parities live in the 2*cin lane slab of
        # col-pair `ow`, so one K=2*cin matmul replaces two and avoids the
        # lane-misaligned pl.ds(cin, cin) slice entirely.
        t01 = x_ref[:, pl.ds(rp, ho), par, pl.ds(0, wo), :]
        p = jnp.dot(t01.reshape(m, 2 * cin), w01_ref[kh],
                    preferred_element_type=jnp.float32)
        acc = p if acc is None else acc + p          # first tap initializes acc
        # kw=2: col-pair ow+1, parity 0 -> lane-aligned channels [0, cin).
        t2 = x_ref[:, pl.ds(rp, ho), par, pl.ds(1, wo), pl.ds(0, cin)]
        acc = acc + jnp.dot(t2.reshape(m, cin), w2_ref[kh],
                            preferred_element_type=jnp.float32)
    acc = acc + b_ref[...].astype(jnp.float32)       # bias once, in f32
    o_ref[...] = acc.astype(o_ref.dtype)             # single cast, single store


def _ceil_to(x, m):
    return -(-x // m) * m


def _vmem_block_bytes(shape, dtype):
    """Rough VMEM footprint of one block: last two dims padded to (sublane, 128)."""
    itemsize = jnp.dtype(dtype).itemsize
    dims = [1, 1] + list(shape)
    lanes = _ceil_to(dims[-1], 128)
    subs = _ceil_to(dims[-2], max(1, 32 // itemsize))
    n = lanes * subs
    for d in dims[:-2]:
        n *= d
    return n * itemsize


def _vmem_capacity_bytes():
    """Physical VMEM per core; conservative 64 MiB (v7x) fallback."""
    try:
        cap = getattr(pltpu.get_tpu_info(), "vmem_capacity_bytes", None)
        if cap:
            return int(cap)
    except Exception:
        pass
    return 64 * 1024 * 1024


def downsample_block_nhwc(x_nhwc, weight, bias, *, compute_dtype=jnp.bfloat16):
    """DownSampleBlock forward on NHWC activations (no layout transposes).

    x_nhwc : (N, H, W, C)
    weight : (Cout, Cin, 3, 3)   PyTorch OIHW
    bias   : (Cout,)
    compute_dtype: matmul input dtype (accumulation is always f32).  bf16 halves
        HBM/VMEM traffic on this memory-bound op; pass jnp.float32 (or None to
        keep the input dtype) for parity with the f32 PyTorch module.
    Returns (N, Ho, Wo, Cout).
    """
    N, H, W, C = x_nhwc.shape
    Cout, Cin, KH, KW = weight.shape
    assert Cin == C and KH == 3 and KW == 3, (weight.shape, C)

    out_dtype = x_nhwc.dtype
    cdt = x_nhwc.dtype if compute_dtype is None else compute_dtype

    # F.pad(x, (0,1,0,1)): +1 row bottom, +1 col right; then pad to even so the
    # (pair, parity) split is exact.  The extra parity pad row/col is never read.
    Hp, Wp = H + 1, W + 1
    Ho, Wo = (Hp - 3) // 2 + 1, (Wp - 3) // 2 + 1
    Hp2, Wp2 = Hp + Hp % 2, Wp + Wp % 2
    HP, WP = Hp2 // 2, Wp2 // 2

    x = jnp.pad(x_nhwc, ((0, 0), (0, Hp2 - H), (0, Wp2 - W), (0, 0)))
    # Free (row-major) reshape: rows -> (pair, parity); column parity folds into
    # the lane (channel) axis.
    x = x.reshape(N, HP, 2, WP, 2 * C).astype(cdt)

    # OIHW -> (kh, kw, cin, cout); stack kw=0,1 along K (matches the 2C lane fold).
    w = jnp.transpose(weight, (2, 3, 1, 0))                          # (3,3,C,Cout)
    w01 = jnp.concatenate([w[:, 0], w[:, 1]], axis=1).astype(cdt)    # (3,2C,Cout)
    w2 = w[:, 2].astype(cdt)                                         # (3, C,Cout)
    b2 = bias.astype(jnp.float32).reshape(1, Cout)

    # Cout tiling: keeps the f32 accumulator vreg-sized at production channel
    # counts and gives megacore (v7x) a second parallel axis.
    if Cout % 128 == 0:
        tc = 256 if Cout % 256 == 0 else 128
    else:
        tc = Cout            # small-C configs fit in one lane tile anyway

    # Batch blocking: fold `bn` images into the matmul M dimension so each grid
    # step amortizes per-step pipeline overhead and issues roofline-sized DMAs.
    cap = _vmem_capacity_bytes()
    budget = cap // 2        # headroom for compiler scratch / metadata
    w_bytes = (_vmem_block_bytes((3, 2 * C, tc), cdt)
               + _vmem_block_bytes((3, C, tc), cdt)
               + _vmem_block_bytes((1, tc), jnp.float32))

    def pipelined_bytes(bn_):   # double-buffered activation + output blocks
        return 2 * (_vmem_block_bytes((bn_, HP, 2, WP, 2 * C), cdt)
                    + _vmem_block_bytes((bn_ * Ho * Wo, tc), out_dtype))

    bn = 1
    for cand in range(min(N, 8), 0, -1):
        if N % cand == 0 and pipelined_bytes(cand) + w_bytes <= budget:
            bn = cand
            break
    if (bn * Ho * Wo) % 8 != 0:
        bn = N               # block == full dim along that axis -> always legal

    # VMEM limit derived from actual block sizes, capped below physical VMEM.
    vmem_limit = int(min(cap * 3 // 4,
                         max(8 * 1024 * 1024,
                             2 * (pipelined_bytes(bn) + w_bytes))))

    kernel = functools.partial(_downsample_conv_kernel,
                               bn=bn, ho=Ho, wo=Wo, cin=C)

    out = pl.pallas_call(
        kernel,
        out_shape=jax.ShapeDtypeStruct((N * Ho * Wo, Cout), out_dtype),
        grid_spec=pltpu.PrefetchScalarGridSpec(
            num_scalar_prefetch=0,
            grid=(N // bn, Cout // tc),
            in_specs=[
                # bn padded images per step along i; weights sliced along j only
                # (constant across i -> stay VMEM resident while activations pipeline).
                pl.BlockSpec((bn, HP, 2, WP, 2 * C),
                             lambda i, j: (i, 0, 0, 0, 0)),
                pl.BlockSpec((3, 2 * C, tc), lambda i, j: (0, 0, j)),
                pl.BlockSpec((3, C, tc), lambda i, j: (0, 0, j)),
                pl.BlockSpec((1, tc), lambda i, j: (0, j)),
            ],
            out_specs=pl.BlockSpec((bn * Ho * Wo, tc), lambda i, j: (i, j)),
        ),
        compiler_params=pltpu.CompilerParams(
            dimension_semantics=("parallel", "parallel"),
            vmem_limit_bytes=vmem_limit,
        ),
    )(x, w01, w2, b2)

    return out.reshape(N, Ho, Wo, Cout)


def downsample_block(x_nchw, weight, bias, *, compute_dtype=jnp.bfloat16):
    """Equivalent of DownSampleBlock.forward (NCHW in / NCHW out)."""
    x = jnp.transpose(x_nchw, (0, 2, 3, 1))                  # NCHW -> NHWC
    y = downsample_block_nhwc(x, weight, bias, compute_dtype=compute_dtype)
    return jnp.transpose(y, (0, 3, 1, 2))                    # NHWC -> NCHW


if __name__ == "__main__":
    key = jax.random.PRNGKey(0)
    kx, kw, kb = jax.random.split(key, 3)

    N, C, H, W = 2, 4, 16, 16
    x = jax.random.normal(kx, (N, C, H, W), jnp.float32)

    # Deterministic Conv2d(channels, channels, 3) parameters (PyTorch init bound).
    fan_in = C * 3 * 3
    bound = 1.0 / (fan_in ** 0.5)
    weight = jax.random.uniform(kw, (C, C, 3, 3), jnp.float32, -bound, bound)
    bias = jax.random.uniform(kb, (C,), jnp.float32, -bound, bound)

    # Reference (pure JAX/XLA conv) to validate semantics.
    x_pad = jnp.pad(x, ((0, 0), (0, 0), (0, 1), (0, 1)))
    ref = jax.lax.conv_general_dilated(
        x_pad, weight, window_strides=(2, 2), padding="VALID",
        dimension_numbers=("NCHW", "OIHW", "NCHW"),
    ) + bias[None, :, None, None]

    # Exact-semantics path (f32 compute, f32 accumulation).
    y_f32 = jax.jit(functools.partial(downsample_block, compute_dtype=jnp.float32))(
        x, weight, bias)
    y_f32 = jax.block_until_ready(y_f32)
    assert y_f32.shape == ref.shape == (N, C, 8, 8), (y_f32.shape, ref.shape)
    assert jnp.allclose(y_f32, ref, atol=1e-4, rtol=1e-4)

    # Default path (bf16 compute, f32 accumulation) — looser tolerance.
    y_bf16 = jax.jit(downsample_block)(x, weight, bias)
    y_bf16 = jax.block_until_ready(y_bf16)
    assert y_bf16.shape == ref.shape
    assert jnp.allclose(y_bf16, ref, atol=5e-2, rtol=5e-2)

    print("KERNEL_OK")
</pallas_src>

<mosaic_0001>
module attributes {stable_mosaic.version = 11 : i64} {
  func.func @_downsample_conv_kernel(%arg0: i32, %arg1: i32, %arg2: memref<2x9x2x9x8xf32, #tpu.memory_space<vmem>>, %arg3: memref<3x8x4xf32, #tpu.memory_space<vmem>>, %arg4: memref<3x4x4xf32, #tpu.memory_space<vmem>>, %arg5: memref<1x4xf32, #tpu.memory_space<vmem>>, %arg6: memref<128x4xf32, #tpu.memory_space<vmem>>) attributes {dimension_semantics = [#tpu.dimension_semantics<parallel>, #tpu.dimension_semantics<parallel>], iteration_bounds = array<i64: 1, 1>, scalar_prefetch = 0 : i64, scratch_operands = 0 : i64, tpu.core_type = #tpu.core_type<tc>, window_params = [{transform_indices = @transform_0, window_bounds = array<i64: 2, 9, 2, 9, 8>}, {transform_indices = @transform_1, window_bounds = array<i64: 3, 8, 4>}, {transform_indices = @transform_2, window_bounds = array<i64: 3, 4, 4>}, {transform_indices = @transform_3, window_bounds = array<i64: 1, 4>}, {transform_indices = @transform_4, window_bounds = array<i64: 128, 4>}]} {
    %c0 = arith.constant 0 : index
    %c0_0 = arith.constant 0 : index
    %c0_1 = arith.constant 0 : index
    %c0_2 = arith.constant 0 : index
    %c0_3 = arith.constant 0 : index
    %0 = vector.load %arg2[%c0, %c0_0, %c0_1, %c0_2, %c0_3] : memref<2x9x2x9x8xf32, #tpu.memory_space<vmem>>, vector<2x8x1x8x8xf32>
    %1 = vector.shape_cast %0 : vector<2x8x1x8x8xf32> to vector<2x8x8x8xf32>
    %2 = vector.shape_cast %1 : vector<2x8x8x8xf32> to vector<128x8xf32>
    %c0_4 = arith.constant 0 : index
    %c0_5 = arith.constant 0 : index
    %c0_6 = arith.constant 0 : index
    %3 = vector.load %arg3[%c0_4, %c0_5, %c0_6] : memref<3x8x4xf32, #tpu.memory_space<vmem>>, vector<1x8x4xf32>
    %4 = vector.shape_cast %3 : vector<1x8x4xf32> to vector<8x4xf32>
    %cst = arith.constant dense<0.000000e+00> : vector<128x4xf32>
    %5 = tpu.matmul %2, %4, %cst {dimension_numbers = #tpu.dot_dimension_numbers<[1], [0], [0], [1], [0, 0, 1, 1], [], []>} : vector<128x8xf32>, vector<8x4xf32>, vector<128x4xf32> -> vector<128x4xf32>
    %c0_7 = arith.constant 0 : index
    %c0_8 = arith.constant 0 : index
    %c0_9 = arith.constant 0 : index
    %c1 = arith.constant 1 : index
    %c0_10 = arith.constant 0 : index
    %6 = vector.load %arg2[%c0_7, %c0_8, %c0_9, %c1, %c0_10] : memref<2x9x2x9x8xf32, #tpu.memory_space<vmem>>, vector<2x8x1x8x4xf32>
    %7 = vector.shape_cast %6 : vector<2x8x1x8x4xf32> to vector<2x8x8x4xf32>
    %8 = vector.shape_cast %7 : vector<2x8x8x4xf32> to vector<128x4xf32>
    %c0_11 = arith.constant 0 : index
    %c0_12 = arith.constant 0 : index
    %c0_13 = arith.constant 0 : index
    %9 = vector.load %arg4[%c0_11, %c0_12, %c0_13] : memref<3x4x4xf32, #tpu.memory_space<vmem>>, vector<1x4x4xf32>
    %10 = vector.shape_cast %9 : vector<1x4x4xf32> to vector<4x4xf32>
    %cst_14 = arith.constant dense<0.000000e+00> : vector<128x4xf32>
    %11 = tpu.matmul %8, %10, %cst_14 {dimension_numbers = #tpu.dot_dimension_numbers<[1], [0], [0], [1], [0, 0, 1, 1], [], []>} : vector<128x4xf32>, vector<4x4xf32>, vector<128x4xf32> -> vector<128x4xf32>
    %12 = arith.addf %5, %11 : vector<128x4xf32>
    %c0_15 = arith.constant 0 : index
    %c0_16 = arith.constant 0 : index
    %c1_17 = arith.constant 1 : index
    %c0_18 = arith.constant 0 : index
    %c0_19 = arith.constant 0 : index
    %13 = vector.load %arg2[%c0_15, %c0_16, %c1_17, %c0_18, %c0_19] : memref<2x9x2x9x8xf32, #tpu.memory_space<vmem>>, vector<2x8x1x8x8xf32>
    %14 = vector.shape_cast %13 : vector<2x8x1x8x8xf32> to vector<2x8x8x8xf32>
    %15 = vector.shape_cast %14 : vector<2x8x8x8xf32> to vector<128x8xf32>
    %c1_20 = arith.constant 1 : index
    %c0_21 = arith.constant 0 : index
    %c0_22 = arith.constant 0 : index
    %16 = vector.load %arg3[%c1_20, %c0_21, %c0_22] : memref<3x8x4xf32, #tpu.memory_space<vmem>>, vector<1x8x4xf32>
    %17 = vector.shape_cast %16 : vector<1x8x4xf32> to vector<8x4xf32>
    %cst_23 = arith.constant dense<0.000000e+00> : vector<128x4xf32>
    %18 = tpu.matmul %15, %17, %cst_23 {dimension_numbers = #tpu.dot_dimension_numbers<[1], [0], [0], [1], [0, 0, 1, 1], [], []>} : vector<128x8xf32>, vector<8x4xf32>, vector<128x4xf32> -> vector<128x4xf32>
    %19 = arith.addf %12, %18 : vector<128x4xf32>
    %c0_24 = arith.constant 0 : index
    %c0_25 = arith.constant 0 : index
    %c1_26 = arith.constant 1 : index
    %c1_27 = arith.constant 1 : index
    %c0_28 = arith.constant 0 : index
    %20 = vector.load %arg2[%c0_24, %c0_25, %c1_26, %c1_27, %c0_28] : memref<2x9x2x9x8xf32, #tpu.memory_space<vmem>>, vector<2x8x1x8x4xf32>
    %21 = vector.shape_cast %20 : vector<2x8x1x8x4xf32> to vector<2x8x8x4xf32>
    %22 = vector.shape_cast %21 : vector<2x8x8x4xf32> to vector<128x4xf32>
    %c1_29 = arith.constant 1 : index
    %c0_30 = arith.constant 0 : index
    %c0_31 = arith.constant 0 : index
    %23 = vector.load %arg4[%c1_29, %c0_30, %c0_31] : memref<3x4x4xf32, #tpu.memory_space<vmem>>, vector<1x4x4xf32>
    %24 = vector.shape_cast %23 : vector<1x4x4xf32> to vector<4x4xf32>
    %cst_32 = arith.constant dense<0.000000e+00> : vector<128x4xf32>
    %25 = tpu.matmul %22, %24, %cst_32 {dimension_numbers = #tpu.dot_dimension_numbers<[1], [0], [0], [1], [0, 0, 1, 1], [], []>} : vector<128x4xf32>, vector<4x4xf32>, vector<128x4xf32> -> vector<128x4xf32>
    %26 = arith.addf %19, %25 : vector<128x4xf32>
    %c0_33 = arith.constant 0 : index
    %c1_34 = arith.constant 1 : index
    %c0_35 = arith.constant 0 : index
    %c0_36 = arith.constant 0 : index
    %c0_37 = arith.constant 0 : index
    %27 = vector.load %arg2[%c0_33, %c1_34, %c0_35, %c0_36, %c0_37] : memref<2x9x2x9x8xf32, #tpu.memory_space<vmem>>, vector<2x8x1x8x8xf32>
    %28 = vector.shape_cast %27 : vector<2x8x1x8x8xf32> to vector<2x8x8x8xf32>
    %29 = vector.shape_cast %28 : vector<2x8x8x8xf32> to vector<128x8xf32>
    %c2 = arith.constant 2 : index
    %c0_38 = arith.constant 0 : index
    %c0_39 = arith.constant 0 : index
    %30 = vector.load %arg3[%c2, %c0_38, %c0_39] : memref<3x8x4xf32, #tpu.memory_space<vmem>>, vector<1x8x4xf32>
    %31 = vector.shape_cast %30 : vector<1x8x4xf32> to vector<8x4xf32>
    %cst_40 = arith.constant dense<0.000000e+00> : vector<128x4xf32>
    %32 = tpu.matmul %29, %31, %cst_40 {dimension_numbers = #tpu.dot_dimension_numbers<[1], [0], [0], [1], [0, 0, 1, 1], [], []>} : vector<128x8xf32>, vector<8x4xf32>, vector<128x4xf32> -> vector<128x4xf32>
    %33 = arith.addf %26, %32 : vector<128x4xf32>
    %c0_41 = arith.constant 0 : index
    %c1_42 = arith.constant 1 : index
    %c0_43 = arith.constant 0 : index
    %c1_44 = arith.constant 1 : index
    %c0_45 = arith.constant 0 : index
    %34 = vector.load %arg2[%c0_41, %c1_42, %c0_43, %c1_44, %c0_45] : memref<2x9x2x9x8xf32, #tpu.memory_space<vmem>>, vector<2x8x1x8x4xf32>
    %35 = vector.shape_cast %34 : vector<2x8x1x8x4xf32> to vector<2x8x8x4xf32>
    %36 = vector.shape_cast %35 : vector<2x8x8x4xf32> to vector<128x4xf32>
    %c2_46 = arith.constant 2 : index
    %c0_47 = arith.constant 0 : index
    %c0_48 = arith.constant 0 : index
    %37 = vector.load %arg4[%c2_46, %c0_47, %c0_48] : memref<3x4x4xf32, #tpu.memory_space<vmem>>, vector<1x4x4xf32>
    %38 = vector.shape_cast %37 : vector<1x4x4xf32> to vector<4x4xf32>
    %cst_49 = arith.constant dense<0.000000e+00> : vector<128x4xf32>
    %39 = tpu.matmul %36, %38, %cst_49 {dimension_numbers = #tpu.dot_dimension_numbers<[1], [0], [0], [1], [0, 0, 1, 1], [], []>} : vector<128x4xf32>, vector<4x4xf32>, vector<128x4xf32> -> vector<128x4xf32>
    %40 = arith.addf %33, %39 : vector<128x4xf32>
    %c0_50 = arith.constant 0 : index
    %c0_51 = arith.constant 0 : index
    %41 = vector.load %arg5[%c0_50, %c0_51] : memref<1x4xf32, #tpu.memory_space<vmem>>, vector<1x4xf32>
    %42 = vector.broadcast %41 : vector<1x4xf32> to vector<128x4xf32>
    %43 = arith.addf %40, %42 : vector<128x4xf32>
    %c0_52 = arith.constant 0 : index
    %c0_53 = arith.constant 0 : index
    %44 = vector.load %arg6[%c0_52, %c0_53] : memref<128x4xf32, #tpu.memory_space<vmem>>, vector<128x4xf32>
    tpu.vector_store %arg6[%c0_52, %c0_53], %43 {strides = array<i32>} : memref<128x4xf32, #tpu.memory_space<vmem>>, vector<128x4xf32>,
    return
  }
  func.func @transform_0(%arg0: i32, %arg1: i32) -> (i32, i32, i32, i32, i32) {
    %c0_i32 = arith.constant 0 : i32
    %c0_i32_0 = arith.constant 0 : i32
    %c0_i32_1 = arith.constant 0 : i32
    %c0_i32_2 = arith.constant 0 : i32
    %c0_i32_3 = arith.constant 0 : i32
    return %arg0, %c0_i32, %c0_i32_0, %c0_i32_1, %c0_i32_2 : i32, i32, i32, i32, i32
  }
  func.func @transform_1(%arg0: i32, %arg1: i32) -> (i32, i32, i32) {
    %c0_i32 = arith.constant 0 : i32
    %c0_i32_0 = arith.constant 0 : i32
    %c0_i32_1 = arith.constant 0 : i32
    return %c0_i32, %c0_i32_0, %arg1 : i32, i32, i32
  }
  func.func @transform_2(%arg0: i32, %arg1: i32) -> (i32, i32, i32) {
    %c0_i32 = arith.constant 0 : i32
    %c0_i32_0 = arith.constant 0 : i32
    %c0_i32_1 = arith.constant 0 : i32
    return %c0_i32, %c0_i32_0, %arg1 : i32, i32, i32
  }
  func.func @transform_3(%arg0: i32, %arg1: i32) -> (i32, i32) {
    %c0_i32 = arith.constant 0 : i32
    %c0_i32_0 = arith.constant 0 : i32
    return %c0_i32, %arg1 : i32, i32
  }
  func.func @transform_4(%arg0: i32, %arg1: i32) -> (i32, i32) {
    %c0_i32 = arith.constant 0 : i32
    return %arg0, %arg1 : i32, i32
  }
}

</mosaic_0001>

<llo_original>
// kernel: downsample_block.1
$region0: #{downsample_block.1}
  #allocation0 [shape = 'u32[]', space=smem, size = 0x4, offset = 0x4, fixed_abs, tag = 'smem constant byte address 0x4 - core index']
  #allocation1 [shape = 'u32[72,128]{1,0:T(1,128)}', space=vmem, size = 0x9000, scoped, tag = 'internal scratch']
  %s0 = inlined_call_operand.vmem [shape: f32[2,9,2,9,8], index: 0, kind: input, shape index: {}]
  %s1 = inlined_call_operand.vmem [shape: f32[3,8,4], index: 1, kind: input, shape index: {}]
  %s2 = inlined_call_operand.vmem [shape: f32[3,4,4], index: 2, kind: input, shape index: {}]
  %s3 = inlined_call_operand.vmem [shape: f32[1,4], index: 3, kind: input, shape index: {}]
  %s4 = inlined_call_operand.vmem [shape: f32[128,4], index: 4, kind: output, shape index: {}]
  %s5 = sld [smem:[#allocation0]]
  $region26: #{downsample_block.1} parent=0
    _
  %s7 = ssub.s32 1, %s5
  %s8 = scalar_select 0, %s7, %s5
  // Predicated region
  $region2: #{downsample_block.1} parent=0 // pred_check
    _
  $region3: #{downsample_block.1} parent=0 // pred_check_branch
    %10 = sbr.rel (0) target = $region5
  $region4: #{downsample_block.1} parent=0 // pred_region
    _
  $region5: #{downsample_block.1} parent=0 // pred_fallthru
    _
  // Predicated region
  $region6: #{downsample_block.1} parent=0 // pred_check
    _
  $region7: #{downsample_block.1} parent=0 // pred_check_branch
    %12 = sbr.rel (0) target = $region9
  $region8: #{downsample_block.1} parent=0 // pred_region
    _
  $region9: #{downsample_block.1} parent=0 // pred_fallthru
    _
  // Predicated region
  $region10: #{downsample_block.1} parent=0 // pred_check
    _
  $region11: #{downsample_block.1} parent=0 // pred_check_branch
    %14 = sbr.rel (0) target = $region13
  $region12: #{downsample_block.1} parent=0 // pred_region
    _
  $region13: #{downsample_block.1} parent=0 // pred_fallthru
    _
  // Predicated region
  $region14: #{downsample_block.1} parent=0 // pred_check
    _
  $region15: #{downsample_block.1} parent=0 // pred_check_branch
    %16 = sbr.rel (0) target = $region17
  $region16: #{downsample_block.1} parent=0 // pred_region
    _
  $region17: #{downsample_block.1} parent=0 // pred_fallthru
    _
  %v17 = vld [vmem:[%s0] sm:$0xff]
  %v18 = vld [vmem:[%s0 + $0x20] sm:$0xff]
  %v19 = vld [vmem:[%s0 + $0x40] sm:$0xff]
  %v20 = vld [vmem:[%s0 + $0x60] sm:$0xff]
  %v21 = vld [vmem:[%s0 + $0x80] sm:$0xff]
  %v22 = vld [vmem:[%s0 + $0xa0] sm:$0xff]
  %v23 = vld [vmem:[%s0 + $0xc0] sm:$0xff]
  %v24 = vld [vmem:[%s0 + $0xe0] sm:$0xff]
  %v25 = vld [vmem:[%s0 + $0x120] sm:$0xff]
  %v26 = vld [vmem:[%s0 + $0x140] sm:$0xff]
  %v27 = vld [vmem:[%s0 + $0x160] sm:$0xff]
  %v28 = vld [vmem:[%s0 + $0x180] sm:$0xff]
  %v29 = vld [vmem:[%s0 + $0x1a0] sm:$0xff]
  %v30 = vld [vmem:[%s0 + $0x1c0] sm:$0xff]
  %v31 = vld [vmem:[%s0 + $0x1e0] sm:$0xff]
  %v32 = vld [vmem:[%s0 + $0x200] sm:$0xff]
  %v33 = vld [vmem:[%s1] sm:$0xff]
  %v34 = vld [vmem:[%s0 + $0x1] sm:$0xff]
  %v35 = vld [vmem:[%s0 + $0x21] sm:$0xff]
  %v36 = vld [vmem:[%s0 + $0x41] sm:$0xff]
  %v37 = vld [vmem:[%s0 + $0x61] sm:$0xff]
  %v38 = vld [vmem:[%s0 + $0x81] sm:$0xff]
  %v39 = vld [vmem:[%s0 + $0xa1] sm:$0xff]
  %v40 = vld [vmem:[%s0 + $0xc1] sm:$0xff]
  %v41 = vld [vmem:[%s0 + $0xe1] sm:$0xff]
  %v42 = vld [vmem:[%s0 + $0x121] sm:$0xff]
  %v43 = vld [vmem:[%s0 + $0x141] sm:$0xff]
  %v44 = vld [vmem:[%s0 + $0x161] sm:$0xff]
  %v45 = vld [vmem:[%s0 + $0x181] sm:$0xff]
  %v46 = vld [vmem:[%s0 + $0x1a1] sm:$0xff]
  %v47 = vld [vmem:[%s0 + $0x1c1] sm:$0xff]
  %v48 = vld [vmem:[%s0 + $0x1e1] sm:$0xff]
  %v49 = vld [vmem:[%s0 + $0x201] sm:$0xff]
  %v50 = vld [vmem:[%s2] sm:$0xf]
  %vm51 = vcmask 31744
  %v53 = vsel %vm51, %v34, 0
  %v56 = vsel %vm51, %v35, 0
  %v59 = vsel %vm51, %v36, 0
  %v62 = vsel %vm51, %v37, 0
  %v65 = vsel %vm51, %v38, 0
  %v68 = vsel %vm51, %v39, 0
  %v71 = vsel %vm51, %v40, 0
  %v74 = vsel %vm51, %v41, 0
  %v77 = vsel %vm51, %v42, 0
  %v80 = vsel %vm51, %v43, 0
  %v83 = vsel %vm51, %v44, 0
  %v86 = vsel %vm51, %v45, 0
  %v89 = vsel %vm51, %v46, 0
  %v92 = vsel %vm51, %v47, 0
  %v95 = vsel %vm51, %v48, 0
  %v98 = vsel %vm51, %v49, 0
  %vm100 = vcmask 1043456
  %v102 = vsel %vm100, %v50, 0
  %104 = vmatpush.msra.mxu0 0.0
  %105 = vmatpush.msra.mxu0 0.0
  %106 = vmatpush.msra.mxu0 0.0
  %107 = vmatpush.msra.mxu0 0.0
  %108 = vmatpush.msra.mxu0 0.0
  %109 = vmatpush.msra.mxu0 0.0
  %110 = vmatpush.msra.mxu0 0.0
  %111 = vmatpush.msra.mxu0 0.0
  %112 = vmatpush.msra.mxu0 0.0
  %113 = vmatpush.msra.mxu0 0.0
  %114 = vmatpush.msra.mxu0 0.0
  %115 = vmatpush.msra.mxu0 0.0
  %116 = vmatpush.msra.mxu0 0.0
  %117 = vmatpush.msra.mxu0 0.0
  %118 = vmatpush.msra.mxu0 0.0
  %119 = vmatpush.msra.mxu0 %v102
  %120 = vmatmul.f32.gmra.mxu0 %v53
  %v121 = vpop.f32.mrf.mxu0
  %v122 = vadd.f32 0.0, %v121
  %123 = vmatmul.f32.gmra.mxu0 %v56
  %v124 = vpop.f32.mrf.mxu0
  %v125 = vadd.f32 0.0, %v124
  %126 = vmatmul.f32.gmra.mxu0 %v59
  %v127 = vpop.f32.mrf.mxu0
  %v128 = vadd.f32 0.0, %v127
  %129 = vmatmul.f32.gmra.mxu0 %v62
  %v130 = vpop.f32.mrf.mxu0
  %v131 = vadd.f32 0.0, %v130
  %132 = vmatmul.f32.gmra.mxu0 %v65
  %v133 = vpop.f32.mrf.mxu0
  %v134 = vadd.f32 0.0, %v133
  %135 = vmatmul.f32.gmra.mxu0 %v68
  %v136 = vpop.f32.mrf.mxu0
  %v137 = vadd.f32 0.0, %v136
  %138 = vmatmul.f32.gmra.mxu0 %v71
  %v139 = vpop.f32.mrf.mxu0
  %v140 = vadd.f32 0.0, %v139
  %141 = vmatmul.f32.gmra.mxu0 %v74
  %v142 = vpop.f32.mrf.mxu0
  %v143 = vadd.f32 0.0, %v142
  %144 = vmatmul.f32.gmra.mxu0 %v77
  %v145 = vpop.f32.mrf.mxu0
  %v146 = vadd.f32 0.0, %v145
  %147 = vmatmul.f32.gmra.mxu0 %v80
  %v148 = vpop.f32.mrf.mxu0
  %v149 = vadd.f32 0.0, %v148
  %150 = vmatmul.f32.gmra.mxu0 %v83
  %v151 = vpop.f32.mrf.mxu0
  %v152 = vadd.f32 0.0, %v151
  %153 = vmatmul.f32.gmra.mxu0 %v86
  %v154 = vpop.f32.mrf.mxu0
  %v155 = vadd.f32 0.0, %v154
  %156 = vmatmul.f32.gmra.mxu0 %v89
  %v157 = vpop.f32.mrf.mxu0
  %v158 = vadd.f32 0.0, %v157
  %159 = vmatmul.f32.gmra.mxu0 %v92
  %v160 = vpop.f32.mrf.mxu0
  %v161 = vadd.f32 0.0, %v160
  %162 = vmatmul.f32.gmra.mxu0 %v95
  %v163 = vpop.f32.mrf.mxu0
  %v164 = vadd.f32 0.0, %v163
  %165 = vmatmul.f32.gmra.mxu0 %v98
  %v166 = vpop.f32.mrf.mxu0
  %v167 = vadd.f32 0.0, %v166
  %168 = vdwg.mxu0
  %vm169 = vcmask 64512
  %v171 = vsel %vm169, %v17, 0
  %v174 = vsel %vm169, %v18, 0
  %v177 = vsel %vm169, %v19, 0
  %v180 = vsel %vm169, %v20, 0
  %v183 = vsel %vm169, %v21, 0
  %v186 = vsel %vm169, %v22, 0
  %v189 = vsel %vm169, %v23, 0
  %v192 = vsel %vm169, %v24, 0
  %v195 = vsel %vm169, %v25, 0
  %v198 = vsel %vm169, %v26, 0
  %v201 = vsel %vm169, %v27, 0
  %v204 = vsel %vm169, %v28, 0
  %v207 = vsel %vm169, %v29, 0
  %v210 = vsel %vm169, %v30, 0
  %v213 = vsel %vm169, %v31, 0
  %v216 = vsel %vm169, %v32, 0
  %218 = vmatpush.msra.mxu0 0.0
  %219 = vmatpush.msra.mxu0 0.0
  %220 = vmatpush.msra.mxu0 0.0
  %221 = vmatpush.msra.mxu0 0.0
  %222 = vmatpush.msra.mxu0 0.0
  %223 = vmatpush.msra.mxu0 0.0
  %224 = vmatpush.msra.mxu0 0.0
  %225 = vmatpush.msra.mxu0 0.0
  %226 = vmatpush.msra.mxu0 0.0
  %227 = vmatpush.msra.mxu0 0.0
  %228 = vmatpush.msra.mxu0 0.0
  %229 = vmatpush.msra.mxu0 0.0
  %230 = vmatpush.msra.mxu0 0.0
  %231 = vmatpush.msra.mxu0 0.0
  %232 = vmatpush.msra.mxu0 0.0
  %233 = vmatpush.msra.mxu0 %v33
  %234 = vmatmul.f32.gmra.mxu0 %v171
  %v235 = vpop.f32.mrf.mxu0
  %v236 = vadd.f32 %v122, %v235
  %237 = vmatmul.f32.gmra.mxu0 %v174
  %v238 = vpop.f32.mrf.mxu0
  %v239 = vadd.f32 %v125, %v238
  %240 = vmatmul.f32.gmra.mxu0 %v177
  %v241 = vpop.f32.mrf.mxu0
  %v242 = vadd.f32 %v128, %v241
  %243 = vmatmul.f32.gmra.mxu0 %v180
  %v244 = vpop.f32.mrf.mxu0
  %v245 = vadd.f32 %v131, %v244
  %246 = vmatmul.f32.gmra.mxu0 %v183
  %v247 = vpop.f32.mrf.mxu0
  %v248 = vadd.f32 %v134, %v247
  %249 = vmatmul.f32.gmra.mxu0 %v186
  %v250 = vpop.f32.mrf.mxu0
  %v251 = vadd.f32 %v137, %v250
  %252 = vmatmul.f32.gmra.mxu0 %v189
  %v253 = vpop.f32.mrf.mxu0
  %v254 = vadd.f32 %v140, %v253
  %255 = vmatmul.f32.gmra.mxu0 %v192
  %v256 = vpop.f32.mrf.mxu0
  %v257 = vadd.f32 %v143, %v256
  %258 = vmatmul.f32.gmra.mxu0 %v195
  %v259 = vpop.f32.mrf.mxu0
  %v260 = vadd.f32 %v146, %v259
  %261 = vmatmul.f32.gmra.mxu0 %v198
  %v262 = vpop.f32.mrf.mxu0
  %v263 = vadd.f32 %v149, %v262
  %264 = vmatmul.f32.gmra.mxu0 %v201
  %v265 = vpop.f32.mrf.mxu0
  %v266 = vadd.f32 %v152, %v265
  %267 = vmatmul.f32.gmra.mxu0 %v204
  %v268 = vpop.f32.mrf.mxu0
  %v269 = vadd.f32 %v155, %v268
  %270 = vmatmul.f32.gmra.mxu0 %v207
  %v271 = vpop.f32.mrf.mxu0
  %v272 = vadd.f32 %v158, %v271
  %273 = vmatmul.f32.gmra.mxu0 %v210
  %v274 = vpop.f32.mrf.mxu0
  %v275 = vadd.f32 %v161, %v274
  %276 = vmatmul.f32.gmra.mxu0 %v213
  %v277 = vpop.f32.mrf.mxu0
  %v278 = vadd.f32 %v164, %v277
  %279 = vmatmul.f32.gmra.mxu0 %v216
  %v280 = vpop.f32.mrf.mxu0
  %v281 = vadd.f32 %v167, %v280
  %282 = vdwg.mxu0
  %s283 = scalar_lea.vmem %s0, 16
  %v284 = vld [vmem:[%s283] sm:$0xff]
  %v285 = vld [vmem:[%s283 + $0x20] sm:$0xff]
  %v286 = vld [vmem:[%s283 + $0x40] sm:$0xff]
  %v287 = vld [vmem:[%s283 + $0x60] sm:$0xff]
  %v288 = vld [vmem:[%s283 + $0x80] sm:$0xff]
  %v289 = vld [vmem:[%s283 + $0xa0] sm:$0xff]
  %v290 = vld [vmem:[%s283 + $0xc0] sm:$0xff]
  %v291 = vld [vmem:[%s283 + $0xe0] sm:$0xff]
  %v292 = vld [vmem:[%s283 + $0x120] sm:$0xff]
  %v293 = vld [vmem:[%s283 + $0x140] sm:$0xff]
  %v294 = vld [vmem:[%s283 + $0x160] sm:$0xff]
  %v295 = vld [vmem:[%s283 + $0x180] sm:$0xff]
  %v296 = vld [vmem:[%s283 + $0x1a0] sm:$0xff]
  %v297 = vld [vmem:[%s283 + $0x1c0] sm:$0xff]
  %v298 = vld [vmem:[%s283 + $0x1e0] sm:$0xff]
  %v299 = vld [vmem:[%s283 + $0x200] sm:$0xff]
  %s300 = scalar_lea.vmem %s1, 8
  %v301 = vld [vmem:[%s300] sm:$0xff]
  %v303 = vsel %vm169, %v284, 0
  %v306 = vsel %vm169, %v285, 0
  %v309 = vsel %vm169, %v286, 0
  %v312 = vsel %vm169, %v287, 0
  %v315 = vsel %vm169, %v288, 0
  %v318 = vsel %vm169, %v289, 0
  %v321 = vsel %vm169, %v290, 0
  %v324 = vsel %vm169, %v291, 0
  %v327 = vsel %vm169, %v292, 0
  %v330 = vsel %vm169, %v293, 0
  %v333 = vsel %vm169, %v294, 0
  %v336 = vsel %vm169, %v295, 0
  %v339 = vsel %vm169, %v296, 0
  %v342 = vsel %vm169, %v297, 0
  %v345 = vsel %vm169, %v298, 0
  %v348 = vsel %vm169, %v299, 0
  %350 = vmatpush.msra.mxu0 0.0
  %351 = vmatpush.msra.mxu0 0.0
  %352 = vmatpush.msra.mxu0 0.0
  %353 = vmatpush.msra.mxu0 0.0
  %354 = vmatpush.msra.mxu0 0.0
  %355 = vmatpush.msra.mxu0 0.0
  %356 = vmatpush.msra.mxu0 0.0
  %357 = vmatpush.msra.mxu0 0.0
  %358 = vmatpush.msra.mxu0 0.0
  %359 = vmatpush.msra.mxu0 0.0
  %360 = vmatpush.msra.mxu0 0.0
  %361 = vmatpush.msra.mxu0 0.0
  %362 = vmatpush.msra.mxu0 0.0
  %363 = vmatpush.msra.mxu0 0.0
  %364 = vmatpush.msra.mxu0 0.0
  %365 = vmatpush.msra.mxu0 %v301
  %366 = vmatmul.f32.gmra.mxu0 %v303
  %v367 = vpop.f32.mrf.mxu0
  %v368 = vadd.f32 0.0, %v367
  %369 = vmatmul.f32.gmra.mxu0 %v306
  %v370 = vpop.f32.mrf.mxu0
  %v371 = vadd.f32 0.0, %v370
  %372 = vmatmul.f32.gmra.mxu0 %v309
  %v373 = vpop.f32.mrf.mxu0
  %v374 = vadd.f32 0.0, %v373
  %375 = vmatmul.f32.gmra.mxu0 %v312
  %v376 = vpop.f32.mrf.mxu0
  %v377 = vadd.f32 0.0, %v376
  %378 = vmatmul.f32.gmra.mxu0 %v315
  %v379 = vpop.f32.mrf.mxu0
  %v380 = vadd.f32 0.0, %v379
  %381 = vmatmul.f32.gmra.mxu0 %v318
  %v382 = vpop.f32.mrf.mxu0
  %v383 = vadd.f32 0.0, %v382
  %384 = vmatmul.f32.gmra.mxu0 %v321
  %v385 = vpop.f32.mrf.mxu0
  %v386 = vadd.f32 0.0, %v385
  %387 = vmatmul.f32.gmra.mxu0 %v324
  %v388 = vpop.f32.mrf.mxu0
  %v389 = vadd.f32 0.0, %v388
  %390 = vmatmul.f32.gmra.mxu0 %v327
  %v391 = vpop.f32.mrf.mxu0
  %v392 = vadd.f32 0.0, %v391
  %393 = vmatmul.f32.gmra.mxu0 %v330
  %v394 = vpop.f32.mrf.mxu0
  %v395 = vadd.f32 0.0, %v394
  %396 = vmatmul.f32.gmra.mxu0 %v333
  %v397 = vpop.f32.mrf.mxu0
  %v398 = vadd.f32 0.0, %v397
  %399 = vmatmul.f32.gmra.mxu0 %v336
  %v400 = vpop.f32.mrf.mxu0
  %v401 = vadd.f32 0.0, %v400
  %402 = vmatmul.f32.gmra.mxu0 %v339
  %v403 = vpop.f32.mrf.mxu0
  %v404 = vadd.f32 0.0, %v403
  %405 = vmatmul.f32.gmra.mxu0 %v342
  %v406 = vpop.f32.mrf.mxu0
  %v407 = vadd.f32 0.0, %v406
  %408 = vmatmul.f32.gmra.mxu0 %v345
  %v409 = vpop.f32.mrf.mxu0
  %v410 = vadd.f32 0.0, %v409
  %411 = vmatmul.f32.gmra.mxu0 %v348
  %v412 = vpop.f32.mrf.mxu0
  %v413 = vadd.f32 0.0, %v412
  %414 = vdwg.mxu0
  %v415 = vadd.f32 %v236, %v368
  %v416 = vadd.f32 %v239, %v371
  %v417 = vadd.f32 %v242, %v374
  %v418 = vadd.f32 %v245, %v377
  %v419 = vadd.f32 %v248, %v380
  %v420 = vadd.f32 %v251, %v383
  %v421 = vadd.f32 %v254, %v386
  %v422 = vadd.f32 %v257, %v389
  %v423 = vadd.f32 %v260, %v392
  %v424 = vadd.f32 %v263, %v395
  %v425 = vadd.f32 %v266, %v398
  %v426 = vadd.f32 %v269, %v401
  %v427 = vadd.f32 %v272, %v404
  %v428 = vadd.f32 %v275, %v407
  %v429 = vadd.f32 %v278, %v410
  %v430 = vadd.f32 %v281, %v413
  %v431 = vld [vmem:[%s283 + $0x1] sm:$0xff]
  %v432 = vld [vmem:[%s283 + $0x21] sm:$0xff]
  %v433 = vld [vmem:[%s283 + $0x41] sm:$0xff]
  %v434 = vld [vmem:[%s283 + $0x61] sm:$0xff]
  %v435 = vld [vmem:[%s283 + $0x81] sm:$0xff]
  %v436 = vld [vmem:[%s283 + $0xa1] sm:$0xff]
  %v437 = vld [vmem:[%s283 + $0xc1] sm:$0xff]
  %v438 = vld [vmem:[%s283 + $0xe1] sm:$0xff]
  %v439 = vld [vmem:[%s283 + $0x121] sm:$0xff]
  %v440 = vld [vmem:[%s283 + $0x141] sm:$0xff]
  %v441 = vld [vmem:[%s283 + $0x161] sm:$0xff]
  %v442 = vld [vmem:[%s283 + $0x181] sm:$0xff]
  %v443 = vld [vmem:[%s283 + $0x1a1] sm:$0xff]
  %v444 = vld [vmem:[%s283 + $0x1c1] sm:$0xff]
  %v445 = vld [vmem:[%s283 + $0x1e1] sm:$0xff]
  %v446 = vld [vmem:[%s283 + $0x201] sm:$0xff]
  %s447 = scalar_lea.vmem %s2, 4
  %v448 = vld [vmem:[%s447] sm:$0xf]
  %v450 = vsel %vm51, %v431, 0
  %v453 = vsel %vm51, %v432, 0
  %v456 = vsel %vm51, %v433, 0
  %v459 = vsel %vm51, %v434, 0
  %v462 = vsel %vm51, %v435, 0
  %v465 = vsel %vm51, %v436, 0
  %v468 = vsel %vm51, %v437, 0
  %v471 = vsel %vm51, %v438, 0
  %v474 = vsel %vm51, %v439, 0
  %v477 = vsel %vm51, %v440, 0
  %v480 = vsel %vm51, %v441, 0
  %v483 = vsel %vm51, %v442, 0
  %v486 = vsel %vm51, %v443, 0
  %v489 = vsel %vm51, %v444, 0
  %v492 = vsel %vm51, %v445, 0
  %v495 = vsel %vm51, %v446, 0
  %v498 = vsel %vm100, %v448, 0
  %500 = vmatpush.msra.mxu0 0.0
  %501 = vmatpush.msra.mxu0 0.0
  %502 = vmatpush.msra.mxu0 0.0
  %503 = vmatpush.msra.mxu0 0.0
  %504 = vmatpush.msra.mxu0 0.0
  %505 = vmatpush.msra.mxu0 0.0
  %506 = vmatpush.msra.mxu0 0.0
  %507 = vmatpush.msra.mxu0 0.0
  %508 = vmatpush.msra.mxu0 0.0
  %509 = vmatpush.msra.mxu0 0.0
  %510 = vmatpush.msra.mxu0 0.0
  %511 = vmatpush.msra.mxu0 0.0
  %512 = vmatpush.msra.mxu0 0.0
  %513 = vmatpush.msra.mxu0 0.0
  %514 = vmatpush.msra.mxu0 0.0
  %515 = vmatpush.msra.mxu0 %v498
  %516 = vmatmul.f32.gmra.mxu0 %v450
  %v517 = vpop.f32.mrf.mxu0
  %v518 = vadd.f32 0.0, %v517
  %519 = vmatmul.f32.gmra.mxu0 %v453
  %v520 = vpop.f32.mrf.mxu0
  %v521 = vadd.f32 0.0, %v520
  %522 = vmatmul.f32.gmra.mxu0 %v456
  %v523 = vpop.f32.mrf.mxu0
  %v524 = vadd.f32 0.0, %v523
  %525 = vmatmul.f32.gmra.mxu0 %v459
  %v526 = vpop.f32.mrf.mxu0
  %v527 = vadd.f32 0.0, %v526
  %528 = vmatmul.f32.gmra.mxu0 %v462
  %v529 = vpop.f32.mrf.mxu0
  %v530 = vadd.f32 0.0, %v529
  %531 = vmatmul.f32.gmra.mxu0 %v465
  %v532 = vpop.f32.mrf.mxu0
  %v533 = vadd.f32 0.0, %v532
  %534 = vmatmul.f32.gmra.mxu0 %v468
  %v535 = vpop.f32.mrf.mxu0
  %v536 = vadd.f32 0.0, %v535
  %537 = vmatmul.f32.gmra.mxu0 %v471
  %v538 = vpop.f32.mrf.mxu0
  %v539 = vadd.f32 0.0, %v538
  %540 = vmatmul.f32.gmra.mxu0 %v474
  %v541 = vpop.f32.mrf.mxu0
  %v542 = vadd.f32 0.0, %v541
  %543 = vmatmul.f32.gmra.mxu0 %v477
  %v544 = vpop.f32.mrf.mxu0
  %v545 = vadd.f32 0.0, %v544
  %546 = vmatmul.f32.gmra.mxu0 %v480
  %v547 = vpop.f32.mrf.mxu0
  %v548 = vadd.f32 0.0, %v547
  %549 = vmatmul.f32.gmra.mxu0 %v483
  %v550 = vpop.f32.mrf.mxu0
  %v551 = vadd.f32 0.0, %v550
  %552 = vmatmul.f32.gmra.mxu0 %v486
  %v553 = vpop.f32.mrf.mxu0
  %v554 = vadd.f32 0.0, %v553
  %555 = vmatmul.f32.gmra.mxu0 %v489
  %v556 = vpop.f32.mrf.mxu0
  %v557 = vadd.f32 0.0, %v556
  %558 = vmatmul.f32.gmra.mxu0 %v492
  %v559 = vpop.f32.mrf.mxu0
  %v560 = vadd.f32 0.0, %v559
  %561 = vmatmul.f32.gmra.mxu0 %v495
  %v562 = vpop.f32.mrf.mxu0
  %v563 = vadd.f32 0.0, %v562
  %564 = vdwg.mxu0
  %v565 = vadd.f32 %v415, %v518
  %v566 = vadd.f32 %v416, %v521
  %v567 = vadd.f32 %v417, %v524
  %v568 = vadd.f32 %v418, %v527
  %v569 = vadd.f32 %v419, %v530
  %v570 = vadd.f32 %v420, %v533
  %v571 = vadd.f32 %v421, %v536
  %v572 = vadd.f32 %v422, %v539
  %v573 = vadd.f32 %v423, %v542
  %v574 = vadd.f32 %v424, %v545
  %v575 = vadd.f32 %v425, %v548
  %v576 = vadd.f32 %v426, %v551
  %v577 = vadd.f32 %v427, %v554
  %v578 = vadd.f32 %v428, %v557
  %v579 = vadd.f32 %v429, %v560
  %v580 = vadd.f32 %v430, %v563
  %s581 = scalar_lea.vmem %s0, 32
  %v582 = vld [vmem:[%s581] sm:$0xff]
  %v583 = vld [vmem:[%s581 + $0x20] sm:$0xff]
  %v584 = vld [vmem:[%s581 + $0x40] sm:$0xff]
  %v585 = vld [vmem:[%s581 + $0x60] sm:$0xff]
  %v586 = vld [vmem:[%s581 + $0x80] sm:$0xff]
  %v587 = vld [vmem:[%s581 + $0xa0] sm:$0xff]
  %v588 = vld [vmem:[%s581 + $0xc0] sm:$0xff]
  %v589 = vld [vmem:[%s581 + $0xe0] sm:$0xff]
  %v590 = vld [vmem:[%s581 + $0x120] sm:$0xff]
  %v591 = vld [vmem:[%s581 + $0x140] sm:$0xff]
  %v592 = vld [vmem:[%s581 + $0x160] sm:$0xff]
  %v593 = vld [vmem:[%s581 + $0x180] sm:$0xff]
  %v594 = vld [vmem:[%s581 + $0x1a0] sm:$0xff]
  %v595 = vld [vmem:[%s581 + $0x1c0] sm:$0xff]
  %v596 = vld [vmem:[%s581 + $0x1e0] sm:$0xff]
  %v597 = vld [vmem:[%s581 + $0x200] sm:$0xff]
  %s598 = scalar_lea.vmem %s1, 16
  %v599 = vld [vmem:[%s598] sm:$0xff]
  %v601 = vsel %vm169, %v582, 0
  %v604 = vsel %vm169, %v583, 0
  %v607 = vsel %vm169, %v584, 0
  %v610 = vsel %vm169, %v585, 0
  %v613 = vsel %vm169, %v586, 0
  %v616 = vsel %vm169, %v587, 0
  %v619 = vsel %vm169, %v588, 0
  %v622 = vsel %vm169, %v589, 0
  %v625 = vsel %vm169, %v590, 0
  %v628 = vsel %vm169, %v591, 0
  %v631 = vsel %vm169, %v592, 0
  %v634 = vsel %vm169, %v593, 0
  %v637 = vsel %vm169, %v594, 0
  %v640 = vsel %vm169, %v595, 0
  %v643 = vsel %vm169, %v596, 0
  %v646 = vsel %vm169, %v597, 0
  %648 = vmatpush.msra.mxu0 0.0
  %649 = vmatpush.msra.mxu0 0.0
  %650 = vmatpush.msra.mxu0 0.0
  %651 = vmatpush.msra.mxu0 0.0
  %652 = vmatpush.msra.mxu0 0.0
  %653 = vmatpush.msra.mxu0 0.0
  %654 = vmatpush.msra.mxu0 0.0
  %655 = vmatpush.msra.mxu0 0.0
  %656 = vmatpush.msra.mxu0 0.0
  %657 = vmatpush.msra.mxu0 0.0
  %658 = vmatpush.msra.mxu0 0.0
  %659 = vmatpush.msra.mxu0 0.0
  %660 = vmatpush.msra.mxu0 0.0
  %661 = vmatpush.msra.mxu0 0.0
  %662 = vmatpush.msra.mxu0 0.0
  %663 = vmatpush.msra.mxu0 %v599
  %664 = vmatmul.f32.gmra.mxu0 %v601
  %v665 = vpop.f32.mrf.mxu0
  %v666 = vadd.f32 0.0, %v665
  %667 = vmatmul.f32.gmra.mxu0 %v604
  %v668 = vpop.f32.mrf.mxu0
  %v669 = vadd.f32 0.0, %v668
  %670 = vmatmul.f32.gmra.mxu0 %v607
  %v671 = vpop.f32.mrf.mxu0
  %v672 = vadd.f32 0.0, %v671
  %673 = vmatmul.f32.gmra.mxu0 %v610
  %v674 = vpop.f32.mrf.mxu0
  %v675 = vadd.f32 0.0, %v674
  %676 = vmatmul.f32.gmra.mxu0 %v613
  %v677 = vpop.f32.mrf.mxu0
  %v678 = vadd.f32 0.0, %v677
  %679 = vmatmul.f32.gmra.mxu0 %v616
  %v680 = vpop.f32.mrf.mxu0
  %v681 = vadd.f32 0.0, %v680
  %682 = vmatmul.f32.gmra.mxu0 %v619
  %v683 = vpop.f32.mrf.mxu0
  %v684 = vadd.f32 0.0, %v683
  %685 = vmatmul.f32.gmra.mxu0 %v622
  %v686 = vpop.f32.mrf.mxu0
  %v687 = vadd.f32 0.0, %v686
  %688 = vmatmul.f32.gmra.mxu0 %v625
  %v689 = vpop.f32.mrf.mxu0
  %v690 = vadd.f32 0.0, %v689
  %691 = vmatmul.f32.gmra.mxu0 %v628
  %v692 = vpop.f32.mrf.mxu0
  %v693 = vadd.f32 0.0, %v692
  %694 = vmatmul.f32.gmra.mxu0 %v631
  %v695 = vpop.f32.mrf.mxu0
  %v696 = vadd.f32 0.0, %v695
  %697 = vmatmul.f32.gmra.mxu0 %v634
  %v698 = vpop.f32.mrf.mxu0
  %v699 = vadd.f32 0.0, %v698
  %700 = vmatmul.f32.gmra.mxu0 %v637
  %v701 = vpop.f32.mrf.mxu0
  %v702 = vadd.f32 0.0, %v701
  %703 = vmatmul.f32.gmra.mxu0 %v640
  %v704 = vpop.f32.mrf.mxu0
  %v705 = vadd.f32 0.0, %v704
  %706 = vmatmul.f32.gmra.mxu0 %v643
  %v707 = vpop.f32.mrf.mxu0
  %v708 = vadd.f32 0.0, %v707
  %709 = vmatmul.f32.gmra.mxu0 %v646
  %v710 = vpop.f32.mrf.mxu0
  %v711 = vadd.f32 0.0, %v710
  %712 = vdwg.mxu0
  %v713 = vadd.f32 %v565, %v666
  %v714 = vadd.f32 %v566, %v669
  %v715 = vadd.f32 %v567, %v672
  %v716 = vadd.f32 %v568, %v675
  %v717 = vadd.f32 %v569, %v678
  %v718 = vadd.f32 %v570, %v681
  %v719 = vadd.f32 %v571, %v684
  %v720 = vadd.f32 %v572, %v687
  %v721 = vadd.f32 %v573, %v690
  %v722 = vadd.f32 %v574, %v693
  %v723 = vadd.f32 %v575, %v696
  %v724 = vadd.f32 %v576, %v699
  %v725 = vadd.f32 %v577, %v702
  %v726 = vadd.f32 %v578, %v705
  %v727 = vadd.f32 %v579, %v708
  %v728 = vadd.f32 %v580, %v711
  %v729 = vld [vmem:[%s581 + $0x1] sm:$0xff]
  %v730 = vld [vmem:[%s581 + $0x21] sm:$0xff]
  %v731 = vld [vmem:[%s581 + $0x41] sm:$0xff]
  %v732 = vld [vmem:[%s581 + $0x61] sm:$0xff]
  %v733 = vld [vmem:[%s581 + $0x81] sm:$0xff]
  %v734 = vld [vmem:[%s581 + $0xa1] sm:$0xff]
  %v735 = vld [vmem:[%s581 + $0xc1] sm:$0xff]
  %v736 = vld [vmem:[%s581 + $0xe1] sm:$0xff]
  %v737 = vld [vmem:[%s581 + $0x121] sm:$0xff]
  %v738 = vld [vmem:[%s581 + $0x141] sm:$0xff]
  %v739 = vld [vmem:[%s581 + $0x161] sm:$0xff]
  %v740 = vld [vmem:[%s581 + $0x181] sm:$0xff]
  %v741 = vld [vmem:[%s581 + $0x1a1] sm:$0xff]
  %v742 = vld [vmem:[%s581 + $0x1c1] sm:$0xff]
  %v743 = vld [vmem:[%s581 + $0x1e1] sm:$0xff]
  %v744 = vld [vmem:[%s581 + $0x201] sm:$0xff]
  %s745 = scalar_lea.vmem %s2, 8
  %v746 = vld [vmem:[%s745] sm:$0xf]
  %v748 = vsel %vm51, %v729, 0
  %v751 = vsel %vm51, %v730, 0
  %v754 = vsel %vm51, %v731, 0
  %v757 = vsel %vm51, %v732, 0
  %v760 = vsel %vm51, %v733, 0
  %v763 = vsel %vm51, %v734, 0
  %v766 = vsel %vm51, %v735, 0
  %v769 = vsel %vm51, %v736, 0
  %v772 = vsel %vm51, %v737, 0
  %v775 = vsel %vm51, %v738, 0
  %v778 = vsel %vm51, %v739, 0
  %v781 = vsel %vm51, %v740, 0
  %v784 = vsel %vm51, %v741, 0
  %v787 = vsel %vm51, %v742, 0
  %v790 = vsel %vm51, %v743, 0
  %v793 = vsel %vm51, %v744, 0
  %v796 = vsel %vm100, %v746, 0
  %798 = vmatpush.msra.mxu0 0.0
  %799 = vmatpush.msra.mxu0 0.0
  %800 = vmatpush.msra.mxu0 0.0
  %801 = vmatpush.msra.mxu0 0.0
  %802 = vmatpush.msra.mxu0 0.0
  %803 = vmatpush.msra.mxu0 0.0
  %804 = vmatpush.msra.mxu0 0.0
  %805 = vmatpush.msra.mxu0 0.0
  %806 = vmatpush.msra.mxu0 0.0
  %807 = vmatpush.msra.mxu0 0.0
  %808 = vmatpush.msra.mxu0 0.0
  %809 = vmatpush.msra.mxu0 0.0
  %810 = vmatpush.msra.mxu0 0.0
  %811 = vmatpush.msra.mxu0 0.0
  %812 = vmatpush.msra.mxu0 0.0
  %813 = vmatpush.msra.mxu0 %v796
  %814 = vmatmul.f32.gmra.mxu0 %v748
  %v815 = vpop.f32.mrf.mxu0
  %v816 = vadd.f32 0.0, %v815
  %817 = vmatmul.f32.gmra.mxu0 %v751
  %v818 = vpop.f32.mrf.mxu0
  %v819 = vadd.f32 0.0, %v818
  %820 = vmatmul.f32.gmra.mxu0 %v754
  %v821 = vpop.f32.mrf.mxu0
  %v822 = vadd.f32 0.0, %v821
  %823 = vmatmul.f32.gmra.mxu0 %v757
  %v824 = vpop.f32.mrf.mxu0
  %v825 = vadd.f32 0.0, %v824
  %826 = vmatmul.f32.gmra.mxu0 %v760
  %v827 = vpop.f32.mrf.mxu0
  %v828 = vadd.f32 0.0, %v827
  %829 = vmatmul.f32.gmra.mxu0 %v763
  %v830 = vpop.f32.mrf.mxu0
  %v831 = vadd.f32 0.0, %v830
  %832 = vmatmul.f32.gmra.mxu0 %v766
  %v833 = vpop.f32.mrf.mxu0
  %v834 = vadd.f32 0.0, %v833
  %835 = vmatmul.f32.gmra.mxu0 %v769
  %v836 = vpop.f32.mrf.mxu0
  %v837 = vadd.f32 0.0, %v836
  %838 = vmatmul.f32.gmra.mxu0 %v772
  %v839 = vpop.f32.mrf.mxu0
  %v840 = vadd.f32 0.0, %v839
  %841 = vmatmul.f32.gmra.mxu0 %v775
  %v842 = vpop.f32.mrf.mxu0
  %v843 = vadd.f32 0.0, %v842
  %844 = vmatmul.f32.gmra.mxu0 %v778
  %v845 = vpop.f32.mrf.mxu0
  %v846 = vadd.f32 0.0, %v845
  %847 = vmatmul.f32.gmra.mxu0 %v781
  %v848 = vpop.f32.mrf.mxu0
  %v849 = vadd.f32 0.0, %v848
  %850 = vmatmul.f32.gmra.mxu0 %v784
  %v851 = vpop.f32.mrf.mxu0
  %v852 = vadd.f32 0.0, %v851
  %853 = vmatmul.f32.gmra.mxu0 %v787
  %v854 = vpop.f32.mrf.mxu0
  %v855 = vadd.f32 0.0, %v854
  %856 = vmatmul.f32.gmra.mxu0 %v790
  %v857 = vpop.f32.mrf.mxu0
  %v858 = vadd.f32 0.0, %v857
  %859 = vmatmul.f32.gmra.mxu0 %v793
  %v860 = vpop.f32.mrf.mxu0
  %v861 = vadd.f32 0.0, %v860
  %862 = vdwg.mxu0
  %v863 = vadd.f32 %v713, %v816
  %v864 = vadd.f32 %v714, %v819
  %v865 = vadd.f32 %v715, %v822
  %v866 = vadd.f32 %v716, %v825
  %v867 = vadd.f32 %v717, %v828
  %v868 = vadd.f32 %v718, %v831
  %v869 = vadd.f32 %v719, %v834
  %v870 = vadd.f32 %v720, %v837
  %v871 = vadd.f32 %v721, %v840
  %v872 = vadd.f32 %v722, %v843
  %v873 = vadd.f32 %v723, %v846
  %v874 = vadd.f32 %v724, %v849
  %v875 = vadd.f32 %v725, %v852
  %v876 = vadd.f32 %v726, %v855
  %v877 = vadd.f32 %v727, %v858
  %v878 = vadd.f32 %v728, %v861
  %v879 = vld [vmem:[%s3] sm:$0x1]
  %v881 = vperm.slane %v879, 0
  %v883 = vadd.f32 %v863, %v881
  %v884 = vadd.f32 %v864, %v881
  %v885 = vadd.f32 %v865, %v881
  %v886 = vadd.f32 %v866, %v881
  %v887 = vadd.f32 %v867, %v881
  %v888 = vadd.f32 %v868, %v881
  %v889 = vadd.f32 %v869, %v881
  %v890 = vadd.f32 %v870, %v881
  %v891 = vadd.f32 %v871, %v881
  %v892 = vadd.f32 %v872, %v881
  %v893 = vadd.f32 %v873, %v881
  %v894 = vadd.f32 %v874, %v881
  %v895 = vadd.f32 %v875, %v881
  %v896 = vadd.f32 %v876, %v881
  %v897 = vadd.f32 %v877, %v881
  %v898 = vadd.f32 %v878, %v881
  %899 = vst.msk [vmem:[%s4] sm:$0xff] %vm51, %v883
  %900 = vst.msk [vmem:[%s4 + $0x8] sm:$0xff] %vm51, %v884
  %901 = vst.msk [vmem:[%s4 + $0x10] sm:$0xff] %vm51, %v885
  %902 = vst.msk [vmem:[%s4 + $0x18] sm:$0xff] %vm51, %v886
  %903 = vst.msk [vmem:[%s4 + $0x20] sm:$0xff] %vm51, %v887
  %904 = vst.msk [vmem:[%s4 + $0x28] sm:$0xff] %vm51, %v888
  %905 = vst.msk [vmem:[%s4 + $0x30] sm:$0xff] %vm51, %v889
  %906 = vst.msk [vmem:[%s4 + $0x38] sm:$0xff] %vm51, %v890
  %907 = vst.msk [vmem:[%s4 + $0x40] sm:$0xff] %vm51, %v891
  %908 = vst.msk [vmem:[%s4 + $0x48] sm:$0xff] %vm51, %v892
  %909 = vst.msk [vmem:[%s4 + $0x50] sm:$0xff] %vm51, %v893
  %910 = vst.msk [vmem:[%s4 + $0x58] sm:$0xff] %vm51, %v894
  %911 = vst.msk [vmem:[%s4 + $0x60] sm:$0xff] %vm51, %v895
  %912 = vst.msk [vmem:[%s4 + $0x68] sm:$0xff] %vm51, %v896
  %913 = vst.msk [vmem:[%s4 + $0x70] sm:$0xff] %vm51, %v897
  %914 = vst.msk [vmem:[%s4 + $0x78] sm:$0xff] %vm51, %v898
  // Predicated region
  $region18: #{downsample_block.1} parent=0 // pred_check
    _
  $region19: #{downsample_block.1} parent=0 // pred_check_branch
    %916 = sbr.rel (0) target = $region21
  $region20: #{downsample_block.1} parent=0 // pred_region
    _
  $region21: #{downsample_block.1} parent=0 // pred_fallthru
    _
  // Predicated region
  $region22: #{downsample_block.1} parent=0 // pred_check
    _
  $region23: #{downsample_block.1} parent=0 // pred_check_branch
    %918 = sbr.rel (0) target = $region25
  $region24: #{downsample_block.1} parent=0 // pred_region
    _
  $region25: #{downsample_block.1} parent=0 // pred_fallthru
    _

</llo_original>
